<compile_context>
chip_gen: v7x
topology: tpu7x:2x2x1
jax: 0.10.0
libtpu: 0.0.40
codegen_flags: <defaults>
</compile_context>

<pallas_src>
import functools

import jax
import jax.numpy as jnp
from jax import lax
from jax.experimental import pallas as pl
from jax.experimental.pallas import tpu as pltpu


_LANE = 128
_S_MAX = 1024     # sublane rows per feature chunk (512 KiB f32 per input per block)


def _round_up(x, m):
    return -(-x // m) * m


def _sublane_multiple(dtype):
    bits = jnp.dtype(dtype).itemsize * 8
    return max(8, 256 // max(bits, 8))   # 8 for 32-bit, 16 for 16-bit, 32 for 8-bit


def _soft_dice_kernel(logits_ref, targets_ref, inter_ref, msum_ref,
                      acc_inter, acc_msum, *,
                      d, s_blk, group, k_parts, n_groups, chunks, cps,
                      need_mask, need_guard):
    """Grid = (batch, split, chunk); chunk is the innermost ("arbitrary") axis."""
    s = pl.program_id(1)
    k = pl.program_id(2)
    chunk = s * cps + k

    @pl.when(k == 0)
    def _():
        acc_inter[...] = jnp.zeros_like(acc_inter)
        acc_msum[...] = jnp.zeros_like(acc_msum)

    def accumulate():
        if need_mask:
            # Flat in-row element index of each (sublane, lane) position of a group.
            flat = (lax.broadcasted_iota(jnp.int32, (group, _LANE), 0) * _LANE
                    + lax.broadcasted_iota(jnp.int32, (group, _LANE), 1))
        base = chunk * s_blk                       # first global sublane row of block
        acc_i = jnp.zeros((k_parts, 8, _LANE), jnp.float32)
        acc_m = jnp.zeros((k_parts, 8, _LANE), jnp.float32)
        # Fused single pass, fully unrolled, static slices; k_parts independent
        # partial accumulators expose ILP to the 4 VALU slots.
        for g in range(n_groups):
            start = g * group
            x = logits_ref[0, start:start + group, :].astype(jnp.float32)
            t = targets_ref[0, start:start + group, :].astype(jnp.float32)
            # Exact sigmoid via tanh: stays on the EUP slot, no VALU divide.
            p = 0.5 * (jnp.tanh(0.5 * x) + 1.0)
            if need_mask:
                limit = d - (base + start) * _LANE
                valid = flat < limit
                p = jnp.where(valid, p, 0.0)
                t = jnp.where(valid, t, 0.0)
            p = p.reshape(k_parts, 8, _LANE)
            t = t.reshape(k_parts, 8, _LANE)
            acc_i = acc_i + p * t                  # intersection partials
            acc_m = acc_m + (p + t)                # fused m1.sum + m2.sum partials
        acc_inter[...] += acc_i
        acc_msum[...] += acc_m

    if need_guard:
        pl.when(chunk < chunks)(accumulate)
    else:
        accumulate()

    @pl.when(k == cps - 1)
    def _():
        inter_ref[...] = jnp.sum(acc_inter[...]).reshape(1, 1, 1)
        msum_ref[...] = jnp.sum(acc_msum[...]).reshape(1, 1, 1)


def soft_dice_loss(logits, targets):
    """Pallas implementation of SoftDiceLoss.forward (returns a scalar)."""
    n = logits.shape[0]
    d = 1
    for dim in logits.shape[1:]:
        d *= dim

    # Free row-major reshapes (match torch .view(num, -1)); NO dtype casts here.
    logits2 = logits.reshape(n, d)
    targets2 = targets.reshape(n, d)

    r = -(-d // _LANE)
    if r * _LANE != d:
        # TODO(synk): zero-copy ragged-lane path (2-D blocks + lane masking); for
        # now only pad when D is not lane-aligned (rare for CNN feature maps).
        pad = r * _LANE - d
        logits2 = jnp.pad(logits2, ((0, 0), (0, pad)))
        targets2 = jnp.pad(targets2, ((0, 0), (0, pad)))
    logits3 = logits2.reshape(n, r, _LANE)          # free bitcast when no pad
    targets3 = targets2.reshape(n, r, _LANE)

    sub = max(_sublane_multiple(logits.dtype), _sublane_multiple(targets.dtype))
    s_blk = min(_S_MAX, _round_up(r, sub))
    chunks = -(-r // s_blk)

    # Sublane-group size of the fused loop; k_parts partial accumulators.
    group = 32
    while s_blk % group != 0:
        group //= 2
    k_parts = group // 8
    n_groups = s_blk // group

    # 2-way chunk-range split so both TensorCores of a dual-TC chip (v7x) stay
    # busy when the batch axis alone cannot balance them (N == 1 or odd).
    n_split = 2 if (chunks >= 2 and n % 2 == 1) else 1
    cps = -(-chunks // n_split)

    need_guard = (n_split * cps != chunks)          # uneven split -> guard tail
    need_mask = (chunks * s_blk * _LANE != d)       # block overhang / lane pad

    kernel = functools.partial(
        _soft_dice_kernel, d=d, s_blk=s_blk, group=group, k_parts=k_parts,
        n_groups=n_groups, chunks=chunks, cps=cps,
        need_mask=need_mask, need_guard=need_guard)

    if need_guard:
        def chunk_map(b, s, k):
            return (b, jnp.minimum(s * cps + k, chunks - 1), 0)
    else:
        def chunk_map(b, s, k):
            return (b, s * cps + k, 0)

    inter, msum = pl.pallas_call(
        kernel,
        out_shape=(jax.ShapeDtypeStruct((n, n_split, 1), jnp.float32),
                   jax.ShapeDtypeStruct((n, n_split, 1), jnp.float32)),
        grid_spec=pltpu.PrefetchScalarGridSpec(
            num_scalar_prefetch=0,
            grid=(n, n_split, cps),
            in_specs=[
                pl.BlockSpec((1, s_blk, _LANE), chunk_map),
                pl.BlockSpec((1, s_blk, _LANE), chunk_map),
            ],
            out_specs=[
                pl.BlockSpec((1, 1, 1), lambda b, s, k: (b, s, 0)),
                pl.BlockSpec((1, 1, 1), lambda b, s, k: (b, s, 0)),
            ],
            scratch_shapes=[
                pltpu.VMEM((k_parts, 8, _LANE), jnp.float32),
                pltpu.VMEM((k_parts, 8, _LANE), jnp.float32),
            ],
        ),
        compiler_params=pltpu.CompilerParams(
            dimension_semantics=("parallel", "parallel", "arbitrary"),
        ),
    )(logits3, targets3)

    # Tiny O(N) epilogue: fold the per-split partials and form the dice scores.
    smooth = jnp.float32(1.0)
    inter_b = jnp.sum(inter, axis=(1, 2))
    msum_b = jnp.sum(msum, axis=(1, 2))
    score = 2.0 * (inter_b + smooth) / (msum_b + smooth)
    return 1.0 - jnp.sum(score) / jnp.float32(n)


def _reference(logits, targets):
    n = logits.shape[0]
    probs = jax.nn.sigmoid(logits).reshape(n, -1)
    t = targets.reshape(n, -1)
    smooth = 1.0
    inter = jnp.sum(probs * t, axis=1)
    score = 2.0 * (inter + smooth) / (jnp.sum(probs, 1) + jnp.sum(t, 1) + smooth)
    return 1.0 - jnp.sum(score) / n


if __name__ == "__main__":
    key = jax.random.PRNGKey(0)
    k1, k2 = jax.random.split(key)
    # NCHW logits and binary targets, same shape.
    logits = jax.random.normal(k1, (2, 4, 16, 16), dtype=jnp.float32)
    targets = (jax.random.uniform(k2, (2, 4, 16, 16)) > 0.5).astype(jnp.float32)

    loss = soft_dice_loss(logits, targets)
    jax.block_until_ready(loss)

    ref = _reference(logits, targets)
    assert jnp.allclose(loss, ref, atol=1e-5, rtol=1e-5), (loss, ref)
    print("KERNEL_OK")
</pallas_src>

<mosaic_0001>
module attributes {stable_mosaic.version = 11 : i64} {
  func.func @_soft_dice_kernel(%arg0: i32, %arg1: i32, %arg2: i32, %arg3: memref<1x8x128xf32, #tpu.memory_space<vmem>>, %arg4: memref<1x8x128xf32, #tpu.memory_space<vmem>>, %arg5: memref<1x1x1xf32, #tpu.memory_space<vmem>>, %arg6: memref<1x1x1xf32, #tpu.memory_space<vmem>>, %arg7: memref<1x8x128xf32, #tpu.memory_space<vmem>>, %arg8: memref<1x8x128xf32, #tpu.memory_space<vmem>>) attributes {dimension_semantics = [#tpu.dimension_semantics<parallel>, #tpu.dimension_semantics<parallel>, #tpu.dimension_semantics<arbitrary>], iteration_bounds = array<i64: 2, 1, 1>, scalar_prefetch = 0 : i64, scratch_operands = 2 : i64, tpu.core_type = #tpu.core_type<tc>, window_params = [{transform_indices = @transform_0, window_bounds = array<i64: 1, 8, 128>}, {transform_indices = @transform_1, window_bounds = array<i64: 1, 8, 128>}, {transform_indices = @transform_2, window_bounds = array<i64: 1, 1, 1>}, {transform_indices = @transform_3, window_bounds = array<i64: 1, 1, 1>}]} {
    %c0_i32 = arith.constant 0 : i32
    %0 = arith.cmpi eq, %arg2, %c0_i32 : i32
    %1 = arith.extui %0 : i1 to i32
    %c0_i32_0 = arith.constant 0 : i32
    %2 = arith.cmpi ne, %1, %c0_i32_0 : i32
    scf.if %2 {
      %cst_24 = arith.constant 0.000000e+00 : f32
      %31 = vector.broadcast %cst_24 : f32 to vector<1x8x128xf32>
      %c0_25 = arith.constant 0 : index
      %c0_26 = arith.constant 0 : index
      %c0_27 = arith.constant 0 : index
      %32 = vector.load %arg7[%c0_25, %c0_26, %c0_27] : memref<1x8x128xf32, #tpu.memory_space<vmem>>, vector<1x8x128xf32>
      tpu.vector_store %arg7[%c0_25, %c0_26, %c0_27], %31 {strides = array<i32>} : memref<1x8x128xf32, #tpu.memory_space<vmem>>, vector<1x8x128xf32>,
      %cst_28 = arith.constant 0.000000e+00 : f32
      %33 = vector.broadcast %cst_28 : f32 to vector<1x8x128xf32>
      %c0_29 = arith.constant 0 : index
      %c0_30 = arith.constant 0 : index
      %c0_31 = arith.constant 0 : index
      %34 = vector.load %arg8[%c0_29, %c0_30, %c0_31] : memref<1x8x128xf32, #tpu.memory_space<vmem>>, vector<1x8x128xf32>
      tpu.vector_store %arg8[%c0_29, %c0_30, %c0_31], %33 {strides = array<i32>} : memref<1x8x128xf32, #tpu.memory_space<vmem>>, vector<1x8x128xf32>,
    } else {
    }
    %cst = arith.constant 0.000000e+00 : f32
    %3 = vector.broadcast %cst : f32 to vector<1x8x128xf32>
    %cst_1 = arith.constant 0.000000e+00 : f32
    %4 = vector.broadcast %cst_1 : f32 to vector<1x8x128xf32>
    %c0 = arith.constant 0 : index
    %c0_2 = arith.constant 0 : index
    %c0_3 = arith.constant 0 : index
    %5 = vector.load %arg3[%c0, %c0_2, %c0_3] : memref<1x8x128xf32, #tpu.memory_space<vmem>>, vector<1x8x128xf32>
    %6 = vector.shape_cast %5 : vector<1x8x128xf32> to vector<8x128xf32>
    %c0_4 = arith.constant 0 : index
    %c0_5 = arith.constant 0 : index
    %c0_6 = arith.constant 0 : index
    %7 = vector.load %arg4[%c0_4, %c0_5, %c0_6] : memref<1x8x128xf32, #tpu.memory_space<vmem>>, vector<1x8x128xf32>
    %8 = vector.shape_cast %7 : vector<1x8x128xf32> to vector<8x128xf32>
    %cst_7 = arith.constant 5.000000e-01 : f32
    %9 = vector.broadcast %cst_7 : f32 to vector<8x128xf32>
    %10 = arith.mulf %9, %6 : vector<8x128xf32>
    %11 = math.tanh %10 : vector<8x128xf32>
    %cst_8 = arith.constant 1.000000e+00 : f32
    %12 = vector.broadcast %cst_8 : f32 to vector<8x128xf32>
    %13 = arith.addf %11, %12 : vector<8x128xf32>
    %cst_9 = arith.constant 5.000000e-01 : f32
    %14 = vector.broadcast %cst_9 : f32 to vector<8x128xf32>
    %15 = arith.mulf %14, %13 : vector<8x128xf32>
    %16 = vector.shape_cast %15 : vector<8x128xf32> to vector<1x8x128xf32>
    %17 = vector.shape_cast %8 : vector<8x128xf32> to vector<1x8x128xf32>
    %18 = arith.mulf %16, %17 : vector<1x8x128xf32>
    %19 = arith.addf %3, %18 : vector<1x8x128xf32>
    %20 = arith.addf %16, %17 : vector<1x8x128xf32>
    %21 = arith.addf %4, %20 : vector<1x8x128xf32>
    %c0_10 = arith.constant 0 : index
    %c0_11 = arith.constant 0 : index
    %c0_12 = arith.constant 0 : index
    %22 = vector.load %arg7[%c0_10, %c0_11, %c0_12] : memref<1x8x128xf32, #tpu.memory_space<vmem>>, vector<1x8x128xf32>
    %23 = arith.addf %22, %19 : vector<1x8x128xf32>
    %c0_13 = arith.constant 0 : index
    %c0_14 = arith.constant 0 : index
    %c0_15 = arith.constant 0 : index
    %24 = vector.load %arg7[%c0_13, %c0_14, %c0_15] : memref<1x8x128xf32, #tpu.memory_space<vmem>>, vector<1x8x128xf32>
    tpu.vector_store %arg7[%c0_13, %c0_14, %c0_15], %23 {strides = array<i32>} : memref<1x8x128xf32, #tpu.memory_space<vmem>>, vector<1x8x128xf32>,
    %c0_16 = arith.constant 0 : index
    %c0_17 = arith.constant 0 : index
    %c0_18 = arith.constant 0 : index
    %25 = vector.load %arg8[%c0_16, %c0_17, %c0_18] : memref<1x8x128xf32, #tpu.memory_space<vmem>>, vector<1x8x128xf32>
    %26 = arith.addf %25, %21 : vector<1x8x128xf32>
    %c0_19 = arith.constant 0 : index
    %c0_20 = arith.constant 0 : index
    %c0_21 = arith.constant 0 : index
    %27 = vector.load %arg8[%c0_19, %c0_20, %c0_21] : memref<1x8x128xf32, #tpu.memory_space<vmem>>, vector<1x8x128xf32>
    tpu.vector_store %arg8[%c0_19, %c0_20, %c0_21], %26 {strides = array<i32>} : memref<1x8x128xf32, #tpu.memory_space<vmem>>, vector<1x8x128xf32>,
    %c0_i32_22 = arith.constant 0 : i32
    %28 = arith.cmpi eq, %arg2, %c0_i32_22 : i32
    %29 = arith.extui %28 : i1 to i32
    %c0_i32_23 = arith.constant 0 : i32
    %30 = arith.cmpi ne, %29, %c0_i32_23 : i32
    scf.if %30 {
      %c0_24 = arith.constant 0 : index
      %c0_25 = arith.constant 0 : index
      %c0_26 = arith.constant 0 : index
      %31 = vector.load %arg7[%c0_24, %c0_25, %c0_26] : memref<1x8x128xf32, #tpu.memory_space<vmem>>, vector<1x8x128xf32>
      %32 = vector.shape_cast %31 : vector<1x8x128xf32> to vector<1x1x8x128xf32>
      %cst_27 = arith.constant dense<0.000000e+00> : vector<1xf32>
      %33 = vector.multi_reduction <add>, %32, %cst_27 [1, 2, 3] : vector<1x1x8x128xf32> to vector<1xf32>
      %34 = vector.shape_cast %33 : vector<1xf32> to vector<1x1x1x1xf32>
      %35 = vector.extract %34[0, 0, 0, 0] : f32 from vector<1x1x1x1xf32>
      %36 = vector.broadcast %35 : f32 to vector<1x1x1xf32>
      %c0_28 = arith.constant 0 : index
      %c0_29 = arith.constant 0 : index
      %c0_30 = arith.constant 0 : index
      %37 = vector.load %arg5[%c0_28, %c0_29, %c0_30] : memref<1x1x1xf32, #tpu.memory_space<vmem>>, vector<1x1x1xf32>
      tpu.vector_store %arg5[%c0_28, %c0_29, %c0_30], %36 {strides = array<i32>} : memref<1x1x1xf32, #tpu.memory_space<vmem>>, vector<1x1x1xf32>,
      %c0_31 = arith.constant 0 : index
      %c0_32 = arith.constant 0 : index
      %c0_33 = arith.constant 0 : index
      %38 = vector.load %arg8[%c0_31, %c0_32, %c0_33] : memref<1x8x128xf32, #tpu.memory_space<vmem>>, vector<1x8x128xf32>
      %39 = vector.shape_cast %38 : vector<1x8x128xf32> to vector<1x1x8x128xf32>
      %cst_34 = arith.constant dense<0.000000e+00> : vector<1xf32>
      %40 = vector.multi_reduction <add>, %39, %cst_34 [1, 2, 3] : vector<1x1x8x128xf32> to vector<1xf32>
      %41 = vector.shape_cast %40 : vector<1xf32> to vector<1x1x1x1xf32>
      %42 = vector.extract %41[0, 0, 0, 0] : f32 from vector<1x1x1x1xf32>
      %43 = vector.broadcast %42 : f32 to vector<1x1x1xf32>
      %c0_35 = arith.constant 0 : index
      %c0_36 = arith.constant 0 : index
      %c0_37 = arith.constant 0 : index
      %44 = vector.load %arg6[%c0_35, %c0_36, %c0_37] : memref<1x1x1xf32, #tpu.memory_space<vmem>>, vector<1x1x1xf32>
      tpu.vector_store %arg6[%c0_35, %c0_36, %c0_37], %43 {strides = array<i32>} : memref<1x1x1xf32, #tpu.memory_space<vmem>>, vector<1x1x1xf32>,
    } else {
    }
    return
  }
  func.func @transform_0(%arg0: i32, %arg1: i32, %arg2: i32) -> (i32, i32, i32) {
    %c1_i32 = arith.constant 1 : i32
    %0 = arith.muli %arg1, %c1_i32 : i32
    %1 = arith.addi %0, %arg2 : i32
    %c0_i32 = arith.constant 0 : i32
    %c0_i32_0 = arith.constant 0 : i32
    return %arg0, %1, %c0_i32 : i32, i32, i32
  }
  func.func @transform_1(%arg0: i32, %arg1: i32, %arg2: i32) -> (i32, i32, i32) {
    %c1_i32 = arith.constant 1 : i32
    %0 = arith.muli %arg1, %c1_i32 : i32
    %1 = arith.addi %0, %arg2 : i32
    %c0_i32 = arith.constant 0 : i32
    %c0_i32_0 = arith.constant 0 : i32
    return %arg0, %1, %c0_i32 : i32, i32, i32
  }
  func.func @transform_2(%arg0: i32, %arg1: i32, %arg2: i32) -> (i32, i32, i32) {
    %c0_i32 = arith.constant 0 : i32
    %c0_i32_0 = arith.constant 0 : i32
    return %arg0, %arg1, %c0_i32 : i32, i32, i32
  }
  func.func @transform_3(%arg0: i32, %arg1: i32, %arg2: i32) -> (i32, i32, i32) {
    %c0_i32 = arith.constant 0 : i32
    %c0_i32_0 = arith.constant 0 : i32
    return %arg0, %arg1, %c0_i32 : i32, i32, i32
  }
}

</mosaic_0001>

<llo_original>
// kernel: tpu_custom_call.1
$region0: #{tpu_custom_call.1}
  #allocation0 [shape = 'u32[]', space=smem, size = 0x4, offset = 0x4, fixed_abs, tag = 'smem constant byte address 0x4 - core index']
  #allocation1 [shape = 'u32[144,128]{1,0:T(1,128)}', space=vmem, size = 0x12000, scoped, tag = 'internal scratch']
  #allocation2 [shape = 'f32[1,8,128]{2,1,0:T(8,128)}', space=vmem, size = 0x1000, scoped, tag = 'scratch operand']
  #allocation3 [shape = 'f32[1,8,128]{2,1,0:T(8,128)}', space=vmem, size = 0x1000, scoped, tag = 'scratch operand']
  %s0 = inlined_call_operand.hbm [shape: f32[2,8,128], index: 0, kind: input, shape index: {}]
  %s1 = inlined_call_operand.hbm [shape: f32[2,8,128], index: 1, kind: input, shape index: {}]
  %s2 = inlined_call_operand.vmem [shape: f32[2,1,1], index: 2, kind: output, shape index: {0}]
  %s3 = inlined_call_operand.vmem [shape: f32[2,1,1], index: 3, kind: output, shape index: {1}]
  %4 = xla_tuple %s2, %s3
  %s5 = sld [smem:[#allocation0]]
  $region65: #{tpu_custom_call.1} parent=0
    _
  %s7 = ssub.s32 1, %s5
  %s8 = scalar_select 0, %s7, %s5
  $region1: #{tpu_custom_call.1} parent=0
    #allocation4 [shape = 'u8[8192]{0}', space=vmem, size = 0x2000, scoped, tag = 'input window, operand 0']
    #allocation5 [shape = 's32[2]{0}', space=sflag, size = 0x8, scoped, tag = 'scoped memory for tpu_custom_call.1']
    #allocation6 [shape = 'u8[8192]{0}', space=vmem, size = 0x2000, scoped, tag = 'input window, operand 1']
    #allocation7 [shape = 's32[2]{0}', space=sflag, size = 0x8, scoped, tag = 'scoped memory for tpu_custom_call.1']
    %9 = vsyncpa [#allocation5], 0
    %s10 = scalar_lea.sflag [#allocation5], 1
    %11 = vsyncpa %s10, 0
    %12 = vsyncpa [#allocation7], 0
    %s13 = scalar_lea.sflag [#allocation7], 1
    %14 = vsyncpa %s13, 0
    loop: start=0, step=1, limit=4
    $region2: #{tpu_custom_call.1} parent=1 // loop_pre_header
      _
    $region3: #{tpu_custom_call.1} parent=1 // loop_header
      %s16 = sphi 0, %s20
      %p17 = scmp.ge.s32.totalorder %s16, 4
      %s23 = sphi 0, %s42
      %s24 = sphi 0, %s38
      %s25 = sphi 0, %s34
      %s26 = sphi 0, %s23
      %s27 = sphi 0, %s24
      %s28 = sphi 0, %s25
      %s29 = sphi 0, %s26
      %s30 = sphi 0, %s27
      %s31 = sphi 0, %s28
      %s49 = sphi 0, %s51
      %s52 = sphi 0, %s49
      %s53 = sphi 0, %s52
      %s69 = sphi 0, %s53
      %s79 = sphi 0, %s81
      %s82 = sphi 0, %s79
      %s83 = sphi 0, %s82
      %s99 = sphi 0, %s83
      %s107 = sphi 0, %s109
      %s110 = sphi 0, %s107
      %s111 = sphi 0, %s110
      %s127 = sphi 0, %s111
      %s135 = sphi 0, %s137
      %s138 = sphi 0, %s135
      %s139 = sphi 0, %s138
      %s155 = sphi 0, %s139
    $region4: #{tpu_custom_call.1} parent=1 // loop_header_branch
      %19 = sbr.rel (%p17) target = $region8
    $region5: #{tpu_custom_call.1} parent=1 // loop_body
      %s21 = ssub.s32 %s16, 1
      %s22 = ssub.s32 %s16, 2
      %s32 = sadd.s32 1, %s25
      %p33 = scmp.ge.s32.totalorder %s32, 1
      %s34 = scalar_select %p33, 0, %s32
      %s35 = sadd.s32 1, %s24
      %s36 = scalar_select %p33, %s35, %s24
      %p37 = scmp.ge.s32.totalorder %s36, 1
      %s38 = scalar_select %p37, 0, %s36
      %s39 = sadd.s32 1, %s23
      %s40 = scalar_select %p37, %s39, %s23
      %p41 = scmp.ge.s32.totalorder %s40, 2
      %s42 = scalar_select %p41, 0, %s40
      %s43 = sadd.s32 %s24, %s25
      %s44 = sadd.s32 %s38, %s34
      %s45 = ssub.s32 %s23, %s42
      %s46 = ssub.s32 %s43, %s44
      %s47 = sor.u32 %s45, %s46
      %p48 = scmp.eq.s32.totalorder %s47, 0
      %s50 = sadd.s32 %s49, 1
      %s51 = scalar_select %p48, %s49, %s50
      %p54 = pneg %p48
      %p55 = scmp.eq.s32.totalorder %s16, 1
      %p56 = por %p54, %p55
      %p57 = scmp.ne.s32.totalorder %s49, %s52
      %p58 = scmp.eq.s32.totalorder %s16, 0
      %p59 = por %p57, %p58
      %p60 = scmp.ne.s32.totalorder %s49, %s52
      %p61 = scmp.eq.s32.totalorder %s21, 1
      %p62 = por %p60, %p61
      %p63 = scmp.ne.s32.totalorder %s52, %s53
      %p64 = scmp.eq.s32.totalorder %s21, 0
      %p65 = por %p63, %p64
      %p66 = scmp.ne.s32.totalorder %s52, %s53
      %p67 = scmp.eq.s32.totalorder %s22, 1
      %p68 = por %p66, %p67
      %p70 = scmp.ne.s32.totalorder %s53, %s69
      %p71 = scmp.eq.s32.totalorder %s22, 0
      %p72 = por %p70, %p71
      %s73 = sadd.s32 %s24, %s25
      %s74 = sadd.s32 %s38, %s34
      %s75 = ssub.s32 %s23, %s42
      %s76 = ssub.s32 %s73, %s74
      %s77 = sor.u32 %s75, %s76
      %p78 = scmp.eq.s32.totalorder %s77, 0
      %s80 = sadd.s32 %s79, 1
      %s81 = scalar_select %p78, %s79, %s80
      %p84 = pneg %p78
      %p85 = scmp.eq.s32.totalorder %s16, 1
      %p86 = por %p84, %p85
      %p87 = scmp.ne.s32.totalorder %s79, %s82
      %p88 = scmp.eq.s32.totalorder %s16, 0
      %p89 = por %p87, %p88
      %p90 = scmp.ne.s32.totalorder %s79, %s82
      %p91 = scmp.eq.s32.totalorder %s21, 1
      %p92 = por %p90, %p91
      %p93 = scmp.ne.s32.totalorder %s82, %s83
      %p94 = scmp.eq.s32.totalorder %s21, 0
      %p95 = por %p93, %p94
      %p96 = scmp.ne.s32.totalorder %s82, %s83
      %p97 = scmp.eq.s32.totalorder %s22, 1
      %p98 = por %p96, %p97
      %p100 = scmp.ne.s32.totalorder %s83, %s99
      %p101 = scmp.eq.s32.totalorder %s22, 0
      %p102 = por %p100, %p101
      %s103 = ssub.s32 %s23, %s42
      %s104 = ssub.s32 %s24, %s38
      %s105 = sor.u32 %s103, %s104
      %p106 = scmp.eq.s32.totalorder %s105, 0
      %s108 = sadd.s32 %s107, 1
      %s109 = scalar_select %p106, %s107, %s108
      %p112 = pneg %p106
      %p113 = scmp.eq.s32.totalorder %s16, 1
      %p114 = por %p112, %p113
      %p115 = scmp.ne.s32.totalorder %s107, %s110
      %p116 = scmp.eq.s32.totalorder %s16, 0
      %p117 = por %p115, %p116
      %p118 = scmp.ne.s32.totalorder %s107, %s110
      %p119 = scmp.eq.s32.totalorder %s21, 1
      %p120 = por %p118, %p119
      %p121 = scmp.ne.s32.totalorder %s110, %s111
      %p122 = scmp.eq.s32.totalorder %s21, 0
      %p123 = por %p121, %p122
      %p124 = scmp.ne.s32.totalorder %s110, %s111
      %p125 = scmp.eq.s32.totalorder %s22, 1
      %p126 = por %p124, %p125
      %p128 = scmp.ne.s32.totalorder %s111, %s127
      %p129 = scmp.eq.s32.totalorder %s22, 0
      %p130 = por %p128, %p129
      %s131 = ssub.s32 %s23, %s42
      %s132 = ssub.s32 %s24, %s38
      %s133 = sor.u32 %s131, %s132
      %p134 = scmp.eq.s32.totalorder %s133, 0
      %s136 = sadd.s32 %s135, 1
      %s137 = scalar_select %p134, %s135, %s136
      %p140 = pneg %p134
      %p141 = scmp.eq.s32.totalorder %s16, 1
      %p142 = por %p140, %p141
      %p143 = scmp.ne.s32.totalorder %s135, %s138
      %p144 = scmp.eq.s32.totalorder %s16, 0
      %p145 = por %p143, %p144
      %p146 = scmp.ne.s32.totalorder %s135, %s138
      %p147 = scmp.eq.s32.totalorder %s21, 1
      %p148 = por %p146, %p147
      %p149 = scmp.ne.s32.totalorder %s138, %s139
      %p150 = scmp.eq.s32.totalorder %s21, 0
      %p151 = por %p149, %p150
      %p152 = scmp.ne.s32.totalorder %s138, %s139
      %p153 = scmp.eq.s32.totalorder %s22, 1
      %p154 = por %p152, %p153
      %p156 = scmp.ne.s32.totalorder %s139, %s155
      %p157 = scmp.eq.s32.totalorder %s22, 0
      %p158 = por %p156, %p157
      %p159 = scmp.le.s32.totalorder 1, %s16
      %p160 = scmp.lt.s32.totalorder %s16, 3
      %p161 = pnand %p159, %p160
      %p162 = pneg %p161
      // Predicated region
      $region9: #{tpu_custom_call.1} parent=5 // pred_check
        _
      $region10: #{tpu_custom_call.1} parent=5 // pred_check_branch
        %164 = sbr.rel (%p161) target = $region12
      $region11: #{tpu_custom_call.1} parent=5 // pred_region
        %s165 = ssub.s32 %s16, 1
      $region12: #{tpu_custom_call.1} parent=5 // pred_fallthru
        _
      %p166 = scmp.lt.s32.totalorder %s16, 2
      // Predicated region
      $region13: #{tpu_custom_call.1} parent=5 // pred_check
        %p167 = pneg %p166
      $region14: #{tpu_custom_call.1} parent=5 // pred_check_branch
        %169 = sbr.rel (%p167) target = $region16
      $region15: #{tpu_custom_call.1} parent=5 // pred_region
        // Predicated region
        $region17: #{tpu_custom_call.1} parent=15 // pred_check
          %p170 = pneg %p59
        $region18: #{tpu_custom_call.1} parent=15 // pred_check_branch
          %172 = sbr.rel (%p170) target = $region20
        $region19: #{tpu_custom_call.1} parent=15 // pred_region
          %s173 = sand.u32 %s49, 1
          %s174 = scalar_lea.sflag [#allocation5], %s173
          %s175 = sand.u32 %s49, 1
          %s176 = smul.addr %s175, 8
          %s177 = scalar_lea.vmem [#allocation4], %s176
          %s178 = sadd.s32 %s24, %s25
          %s180 = ssub.s32 128, 128
          %181 = vsyncadd %s174, %s180
          %s182 = sadd.s32 %s178, %s23
          %s183 = smul.addr %s182, 128
          %s184 = scalar_lea.hbm %s0, %s183
          %s186 = sshll.u32 %s177, 4
          %s187 = int_to_ptr.vmem [resolvable:$true] %s186
          %189 = dma.hbm_to_vmem [thread:$0]  %s184, 128, %s187, %s174
        $region20: #{tpu_custom_call.1} parent=15 // pred_fallthru
          _
        // Predicated region
        $region21: #{tpu_custom_call.1} parent=15 // pred_check
          %p190 = pneg %p89
        $region22: #{tpu_custom_call.1} parent=15 // pred_check_branch
          %192 = sbr.rel (%p190) target = $region24
        $region23: #{tpu_custom_call.1} parent=15 // pred_region
          %s193 = sand.u32 %s79, 1
          %s194 = scalar_lea.sflag [#allocation7], %s193
          %s195 = sand.u32 %s79, 1
          %s196 = smul.addr %s195, 8
          %s197 = scalar_lea.vmem [#allocation6], %s196
          %s198 = sadd.s32 %s24, %s25
          %s200 = ssub.s32 128, 128
          %201 = vsyncadd %s194, %s200
          %s202 = sadd.s32 %s198, %s23
          %s203 = smul.addr %s202, 128
          %s204 = scalar_lea.hbm %s1, %s203
          %s206 = sshll.u32 %s197, 4
          %s207 = int_to_ptr.vmem [resolvable:$true] %s206
          %209 = dma.hbm_to_vmem [thread:$0]  %s204, 128, %s207, %s194
        $region24: #{tpu_custom_call.1} parent=15 // pred_fallthru
          _
      $region16: #{tpu_custom_call.1} parent=5 // pred_fallthru
        _
      %p210 = scmp.le.s32.totalorder 1, %s16
      %p211 = scmp.lt.s32.totalorder %s16, 3
      %p212 = pnand %p210, %p211
      %p213 = pneg %p212
      // Predicated region
      $region25: #{tpu_custom_call.1} parent=5 // pred_check
        _
      $region26: #{tpu_custom_call.1} parent=5 // pred_check_branch
        %215 = sbr.rel (%p212) target = $region28
      $region27: #{tpu_custom_call.1} parent=5 // pred_region
        %s216 = ssub.s32 %s16, 1
        %s217 = sand.u32 %s52, 1
        %s218 = scalar_lea.sflag [#allocation5], %s217
        %s219 = sand.u32 %s52, 1
        %s220 = smul.addr %s219, 8
        %s221 = scalar_lea.vmem [#allocation4], %s220
        // Predicated region
        $region29: #{tpu_custom_call.1} parent=27 // pred_check
          %p222 = pneg %p65
        $region30: #{tpu_custom_call.1} parent=27 // pred_check_branch
          %224 = sbr.rel (%p222) target = $region32
        $region31: #{tpu_custom_call.1} parent=27 // pred_region
          %225 = dma.done %s218, 128
        $region32: #{tpu_custom_call.1} parent=27 // pred_fallthru
          _
        %s226 = sand.u32 %s82, 1
        %s227 = scalar_lea.sflag [#allocation7], %s226
        %s228 = sand.u32 %s82, 1
        %s229 = smul.addr %s228, 8
        %s230 = scalar_lea.vmem [#allocation6], %s229
        // Predicated region
        $region33: #{tpu_custom_call.1} parent=27 // pred_check
          %p231 = pneg %p95
        $region34: #{tpu_custom_call.1} parent=27 // pred_check_branch
          %233 = sbr.rel (%p231) target = $region36
        $region35: #{tpu_custom_call.1} parent=27 // pred_region
          %234 = dma.done %s227, 128
        $region36: #{tpu_custom_call.1} parent=27 // pred_fallthru
          _
        %s235 = sand.u32 %s52, 1
        %s236 = scalar_lea.sflag [#allocation5], %s235
        %s237 = sand.u32 %s52, 1
        %s238 = smul.addr %s237, 8
        %s239 = scalar_lea.vmem [#allocation4], %s238
        %p240 = pneg %p65
        %p241 = pneg %p62
        %s242 = sand.u32 %s82, 1
        %s243 = scalar_lea.sflag [#allocation7], %s242
        %s244 = sand.u32 %s82, 1
        %s245 = smul.addr %s244, 8
        %s246 = scalar_lea.vmem [#allocation6], %s245
        %p247 = pneg %p95
        %p248 = pneg %p92
        %p249 = pneg %p123
        %p250 = pneg %p120
        %p251 = scmp.lt.s32.totalorder %s26, 1
        %s252 = scalar_select %p251, %s26, 1
        %p253 = scmp.lt.s32.totalorder %s27, 0
        %s254 = scalar_select %p253, %s27, 0
        %s255 = sadd.s32 %s254, %s252
        %s256 = scalar_lea.vmem %s2, %s255
        %p257 = pneg %p151
        %p258 = pneg %p148
        %p259 = scmp.lt.s32.totalorder %s26, 1
        %s260 = scalar_select %p259, %s26, 1
        %p261 = scmp.lt.s32.totalorder %s27, 0
        %s262 = scalar_select %p261, %s27, 0
        %s263 = sadd.s32 %s262, %s260
        %s264 = scalar_lea.vmem %s3, %s263
        %s265 = sadd.s32 %s27, %s28
        %s266 = sadd.s32 %s27, %s28
        %p267 = scmp.lt.s32.totalorder %s26, 1
        %s268 = scalar_select %p267, %s26, 1
        %p269 = scmp.lt.s32.totalorder %s27, 0
        %s270 = scalar_select %p269, %s27, 0
        %s271 = sadd.s32 %s270, %s268
        %s272 = scalar_lea.vmem %s2, %s271
        %p273 = scmp.lt.s32.totalorder %s26, 1
        %s274 = scalar_select %p273, %s26, 1
        %p275 = scmp.lt.s32.totalorder %s27, 0
        %s276 = scalar_select %p275, %s27, 0
        %s277 = sadd.s32 %s276, %s274
        %s278 = scalar_lea.vmem %s3, %s277
        %p279 = scmp.eq.s32.totalorder %s28, 0
        // Predicated region
        $region37: #{tpu_custom_call.1} parent=27 // pred_check
          %p280 = pneg %p279
        $region38: #{tpu_custom_call.1} parent=27 // pred_check_branch
          %282 = sbr.rel (%p280) target = $region40
        $region39: #{tpu_custom_call.1} parent=27 // pred_region
          %283 = vst [vmem:[#allocation2] sm:$0xff] 0.0
          %284 = vst [vmem:[#allocation3] sm:$0xff] 0.0
        $region40: #{tpu_custom_call.1} parent=27 // pred_fallthru
          _
        %v285 = vld [vmem:[%s221] sm:$0xff]
        %v286 = vld [vmem:[%s230] sm:$0xff]
        %v287 = vmul.f32 %v285, 0.5
        %v288 = vtanh.pop %v287
        %v289 = vadd.f32 %v288, 1.0
        %v290 = vmul.f32 %v289, 0.5
        %v291 = vmul.f32 %v290, %v286
        %v292 = vadd.f32 %v291, 0.0
        %v293 = vadd.f32 %v290, %v286
        %v294 = vadd.f32 %v293, 0.0
        %v295 = vld [vmem:[#allocation2] sm:$0xff]
        %v296 = vadd.f32 %v295, %v292
        %297 = vst [vmem:[#allocation2] sm:$0xff] %v296
        %v298 = vld [vmem:[#allocation3] sm:$0xff]
        %v299 = vadd.f32 %v298, %v294
        %300 = vst [vmem:[#allocation3] sm:$0xff] %v299
        // Predicated region
        $region41: #{tpu_custom_call.1} parent=27 // pred_check
          %p301 = pneg %p279
        $region42: #{tpu_custom_call.1} parent=27 // pred_check_branch
          %303 = sbr.rel (%p301) target = $region44
        $region43: #{tpu_custom_call.1} parent=27 // pred_region
          %v304 = vld [vmem:[#allocation2] sm:$0xff]
          %305 = vadd.xlane.f32.xlu0 %v304
          %v306 = vpop.xlane.xlu0 %305
          %v307 = vrot.slane %v306, 4
          %v308 = vadd.f32 %v306, %v307
          %v309 = vrot.slane %v308, 2
          %v310 = vadd.f32 %v308, %v309
          %v311 = vrot.slane %v310, 1
          %v312 = vadd.f32 %v310, %v311
          %s313 = vtos %v312
          %v314 = vstv %s313
          %vm315 = vcmask 0
          %316 = vst.msk [vmem:[%s272] sm:$0x1] %vm315, %v314
          %v317 = vld [vmem:[#allocation3] sm:$0xff]
          %318 = vadd.xlane.f32.xlu0 %v317
          %v319 = vpop.xlane.xlu0 %318
          %v320 = vrot.slane %v319, 4
          %v321 = vadd.f32 %v319, %v320
          %v322 = vrot.slane %v321, 2
          %v323 = vadd.f32 %v321, %v322
          %v324 = vrot.slane %v323, 1
          %v325 = vadd.f32 %v323, %v324
          %s326 = vtos %v325
          %v327 = vstv %s326
          %328 = vst.msk [vmem:[%s278] sm:$0x1] %vm315, %v327
        $region44: #{tpu_custom_call.1} parent=27 // pred_fallthru
          _
        %p329 = scmp.lt.s32.totalorder %s26, 1
        %s330 = scalar_select %p329, %s26, 1
        %p331 = scmp.lt.s32.totalorder %s27, 0
        %s332 = scalar_select %p331, %s27, 0
        %s333 = sadd.s32 %s332, %s330
        %s334 = scalar_lea.vmem %s2, %s333
        %p335 = scmp.lt.s32.totalorder %s26, 1
        %s336 = scalar_select %p335, %s26, 1
        %p337 = scmp.lt.s32.totalorder %s27, 0
        %s338 = scalar_select %p337, %s27, 0
        %s339 = sadd.s32 %s338, %s336
        %s340 = scalar_lea.vmem %s3, %s339
        // Predicated region
        $region45: #{tpu_custom_call.1} parent=27 // pred_check
          %p341 = pneg %p120
        $region46: #{tpu_custom_call.1} parent=27 // pred_check_branch
          %343 = sbr.rel (%p341) target = $region48
        $region47: #{tpu_custom_call.1} parent=27 // pred_region
          _
        $region48: #{tpu_custom_call.1} parent=27 // pred_fallthru
          _
        // Predicated region
        $region49: #{tpu_custom_call.1} parent=27 // pred_check
          %p344 = pneg %p148
        $region50: #{tpu_custom_call.1} parent=27 // pred_check_branch
          %346 = sbr.rel (%p344) target = $region52
        $region51: #{tpu_custom_call.1} parent=27 // pred_region
          _
        $region52: #{tpu_custom_call.1} parent=27 // pred_fallthru
          _
      $region28: #{tpu_custom_call.1} parent=5 // pred_fallthru
        _
      %p347 = scmp.le.s32.totalorder 2, %s16
      // Predicated region
      $region53: #{tpu_custom_call.1} parent=5 // pred_check
        %p348 = pneg %p347
      $region54: #{tpu_custom_call.1} parent=5 // pred_check_branch
        %350 = sbr.rel (%p348) target = $region56
      $region55: #{tpu_custom_call.1} parent=5 // pred_region
        %s351 = ssub.s32 %s16, 2
        // Predicated region
        $region57: #{tpu_custom_call.1} parent=55 // pred_check
          %p352 = pneg %p126
        $region58: #{tpu_custom_call.1} parent=55 // pred_check_branch
          %354 = sbr.rel (%p352) target = $region60
        $region59: #{tpu_custom_call.1} parent=55 // pred_region
          %p355 = scmp.lt.s32.totalorder %s29, 1
          %s356 = scalar_select %p355, %s29, 1
          %p357 = scmp.lt.s32.totalorder %s30, 0
          %s358 = scalar_select %p357, %s30, 0
          %s359 = sadd.s32 %s358, %s356
          %s360 = scalar_lea.vmem %s2, %s359
        $region60: #{tpu_custom_call.1} parent=55 // pred_fallthru
          _
        // Predicated region
        $region61: #{tpu_custom_call.1} parent=55 // pred_check
          %p361 = pneg %p154
        $region62: #{tpu_custom_call.1} parent=55 // pred_check_branch
          %363 = sbr.rel (%p361) target = $region64
        $region63: #{tpu_custom_call.1} parent=55 // pred_region
          %p364 = scmp.lt.s32.totalorder %s29, 1
          %s365 = scalar_select %p364, %s29, 1
          %p366 = scmp.lt.s32.totalorder %s30, 0
          %s367 = scalar_select %p366, %s30, 0
          %s368 = sadd.s32 %s367, %s365
          %s369 = scalar_lea.vmem %s3, %s368
        $region64: #{tpu_custom_call.1} parent=55 // pred_fallthru
          _
      $region56: #{tpu_custom_call.1} parent=5 // pred_fallthru
        _
    $region6: #{tpu_custom_call.1} parent=1 // loop_footer
      %s20 = sadd.s32 1, %s16
    $region7: #{tpu_custom_call.1} parent=1 // loop_footer_branch
      %15 = sbr.rel target = $region3
    $region8: #{tpu_custom_call.1} parent=1 // loop_exit
      _
    %370 = vsyncpa [#allocation5], 1
    %s371 = scalar_lea.sflag [#allocation5], 1
    %372 = vsyncpa %s371, 1
    %373 = vsyncpa [#allocation7], 1
    %s374 = scalar_lea.sflag [#allocation7], 1
    %375 = vsyncpa %s374, 1

</llo_original>
